<compile_context>
chip_gen: v7x
topology: tpu7x:2x2x1
jax: 0.10.0
libtpu: 0.0.40
codegen_flags: <defaults>
</compile_context>

<pallas_src>
import math
import jax
import jax.numpy as jnp
from jax.experimental import pallas as pl
from jax.experimental.pallas import tpu as pltpu


def _pool_kernel(w_ref, x_ref, b_ref, o_ref):
    # w_ref: (Cout, K)  resident weight
    # x_ref: (K, tm)    streamed patch-matrix tile (lane-dense in M)
    # b_ref: (Cout, 1)  resident bias
    # o_ref: (Cout, tm) lane-dense output tile
    acc = jnp.dot(w_ref[...], x_ref[...], preferred_element_type=jnp.float32)
    acc = acc + b_ref[...]
    # LeakyReLU(negative_slope=0.1)
    o_ref[...] = jnp.where(acc >= 0, acc, 0.1 * acc).astype(o_ref.dtype)


def _same_pad_amount(size, kernel, stride):
    return max((math.ceil(size / stride) - 1) * stride + kernel - size, 0)


def _round_up(a, b):
    return ((a + b - 1) // b) * b


def _choose_tile_m(M):
    # Lane-dense tile: multiple of 128, large enough to amortize per-step
    # overhead, capped at 1024, and (when M allows) small enough that the
    # grid has >= 2 steps so v7x can shard the 'parallel' axis across cores.
    half = -(-M // 2)
    tm = min(1024, _round_up(half, 128))
    return max(tm, 128)


def pool_layer_forward(x, weight, bias, strides, *, use_bf16=False):
    """x: [B, Cin, H, W] (NCHW, float32)
    weight: [Cout, Cin, sh, sw]  (PyTorch Conv2d layout)
    bias:   [Cout]
    strides: int or (sh, sw) with kernel_size == strides.
    Returns: [B, Cout, Ho, Wo] (NCHW).
    """
    if isinstance(strides, int):
        strides = (strides, strides)
    sh, sw = strides
    B, Cin, H, W = x.shape
    Cout = weight.shape[0]

    # 'same' padding as in the reference custom Conv2d (zero when H % s == 0).
    pad_h = _same_pad_amount(H, sh, sh)
    pad_w = _same_pad_amount(W, sw, sw)
    if pad_h > 0 or pad_w > 0:
        x = jnp.pad(
            x,
            ((0, 0), (0, 0),
             (pad_h // 2, pad_h - pad_h // 2),
             (pad_w // 2, pad_w - pad_w // 2)),
        )
        H, W = x.shape[2], x.shape[3]

    Ho, Wo = H // sh, W // sw
    M = B * Ho * Wo
    K = Cin * sh * sw

    # Transposed patch matrix X^T : [K, M]
    #   K ordered (Cin, kh, kw)  -> matches weight.reshape(Cout, K) contraction
    #   M ordered (B, Ho, Wo)
    xp = x.reshape(B, Cin, Ho, sh, Wo, sw)
    xT = jnp.transpose(xp, (1, 3, 5, 0, 2, 4)).reshape(K, M)

    w_mat = weight.reshape(Cout, K)       # [Cout, K]
    b_mat = bias.reshape(Cout, 1).astype(jnp.float32)

    if use_bf16:
        xT = xT.astype(jnp.bfloat16)
        w_mat = w_mat.astype(jnp.bfloat16)

    # M-tiling: pad M up to a multiple of the tile so every grid step is full.
    tm = _choose_tile_m(M)
    M_pad = _round_up(M, tm)
    if M_pad != M:
        xT = jnp.pad(xT, ((0, 0), (0, M_pad - M)))
    grid = (M_pad // tm,)

    # Explicit VMEM budget: double-buffered streamed tiles + resident params.
    in_elem = 2 if use_bf16 else 4
    vmem_bytes = (2 * (K * tm * in_elem + Cout * tm * 4)
                  + Cout * K * in_elem + Cout * 4
                  + (2 << 20))                       # headroom
    vmem_limit = int(min(max(vmem_bytes, 4 << 20), 32 << 20))

    out_t = pl.pallas_call(
        _pool_kernel,
        out_shape=jax.ShapeDtypeStruct((Cout, M_pad), jnp.float32),
        grid_spec=pltpu.PrefetchScalarGridSpec(
            num_scalar_prefetch=0,
            grid=grid,
            in_specs=[
                pl.BlockSpec((Cout, K), lambda i: (0, 0)),   # weight (resident)
                pl.BlockSpec((K, tm), lambda i: (0, i)),     # X^T tile (streamed)
                pl.BlockSpec((Cout, 1), lambda i: (0, 0)),   # bias   (resident)
            ],
            out_specs=pl.BlockSpec((Cout, tm), lambda i: (0, i)),
        ),
        compiler_params=pltpu.CompilerParams(
            dimension_semantics=("parallel",),
            vmem_limit_bytes=vmem_limit),
    )(w_mat, xT, b_mat)

    # [Cout, M] -> [Cout, B, Ho, Wo] -> NCHW [B, Cout, Ho, Wo]
    out = out_t[:, :M].reshape(Cout, B, Ho, Wo)
    out = jnp.transpose(out, (1, 0, 2, 3)).astype(x.dtype)
    return out


if __name__ == "__main__":
    # Small, deterministic example consistent with the module:
    # in_filters=4, filters=8, strides=2, input NCHW [2, 4, 16, 16].
    key = jax.random.PRNGKey(0)
    k_x, k_w, k_b = jax.random.split(key, 3)

    B, Cin, H, W = 2, 4, 16, 16
    Cout = 8
    strides = (2, 2)

    x = jax.random.normal(k_x, (B, Cin, H, W), dtype=jnp.float32)
    weight = jax.random.normal(
        k_w, (Cout, Cin, strides[0], strides[1]), dtype=jnp.float32) * 0.1
    bias = jax.random.normal(k_b, (Cout,), dtype=jnp.float32) * 0.1

    out = pool_layer_forward(x, weight, bias, strides)
    out = jax.block_until_ready(out)

    assert out.shape == (B, Cout, H // strides[0], W // strides[1]), out.shape

    # Pure-JAX reference check (same math: patch-matmul + bias + leaky relu).
    xp = x.reshape(B, Cin, H // 2, 2, W // 2, 2)
    xp = jnp.transpose(xp, (0, 2, 4, 1, 3, 5)).reshape(-1, Cin * 4)
    ref = xp @ weight.reshape(Cout, -1).T + bias
    ref = jnp.where(ref >= 0, ref, 0.1 * ref)
    ref = jnp.transpose(ref.reshape(B, H // 2, W // 2, Cout), (0, 3, 1, 2))
    assert jnp.allclose(out, ref, atol=1e-5, rtol=1e-5)

    print("KERNEL_OK")
</pallas_src>

<mosaic_0001>
module attributes {stable_mosaic.version = 11 : i64} {
  func.func @_pool_kernel(%arg0: i32, %arg1: memref<8x16xf32, #tpu.memory_space<vmem>>, %arg2: memref<16x128xf32, #tpu.memory_space<vmem>>, %arg3: memref<8x1xf32, #tpu.memory_space<vmem>>, %arg4: memref<8x128xf32, #tpu.memory_space<vmem>>) attributes {dimension_semantics = [#tpu.dimension_semantics<parallel>], iteration_bounds = array<i64: 1>, scalar_prefetch = 0 : i64, scratch_operands = 0 : i64, tpu.core_type = #tpu.core_type<tc>, window_params = [{pipeline_mode = #tpu.pipeline_mode<synchronous>, transform_indices = @transform_0, window_bounds = array<i64: 8, 16>}, {transform_indices = @transform_1, window_bounds = array<i64: 16, 128>}, {pipeline_mode = #tpu.pipeline_mode<synchronous>, transform_indices = @transform_2, window_bounds = array<i64: 8, 1>}, {transform_indices = @transform_3, window_bounds = array<i64: 8, 128>}]} {
    %c0 = arith.constant 0 : index
    %c0_0 = arith.constant 0 : index
    %0 = vector.load %arg1[%c0, %c0_0] : memref<8x16xf32, #tpu.memory_space<vmem>>, vector<8x16xf32>
    %c0_1 = arith.constant 0 : index
    %c0_2 = arith.constant 0 : index
    %1 = vector.load %arg2[%c0_1, %c0_2] : memref<16x128xf32, #tpu.memory_space<vmem>>, vector<16x128xf32>
    %cst = arith.constant dense<0.000000e+00> : vector<8x128xf32>
    %2 = tpu.matmul %0, %1, %cst {dimension_numbers = #tpu.dot_dimension_numbers<[1], [0], [0], [1], [0, 0, 1, 1], [], []>} : vector<8x16xf32>, vector<16x128xf32>, vector<8x128xf32> -> vector<8x128xf32>
    %c0_3 = arith.constant 0 : index
    %c0_4 = arith.constant 0 : index
    %3 = vector.load %arg3[%c0_3, %c0_4] : memref<8x1xf32, #tpu.memory_space<vmem>>, vector<8x1xf32>
    %4 = vector.broadcast %3 : vector<8x1xf32> to vector<8x128xf32>
    %5 = arith.addf %2, %4 : vector<8x128xf32>
    %cst_5 = arith.constant 0.000000e+00 : f32
    %6 = vector.broadcast %cst_5 : f32 to vector<8x128xf32>
    %7 = arith.cmpf oge, %5, %6 : vector<8x128xf32>
    %cst_6 = arith.constant 1.000000e-01 : f32
    %8 = vector.broadcast %cst_6 : f32 to vector<8x128xf32>
    %9 = arith.mulf %8, %5 : vector<8x128xf32>
    %10 = arith.select %7, %5, %9 : vector<8x128xi1>, vector<8x128xf32>
    %c0_7 = arith.constant 0 : index
    %c0_8 = arith.constant 0 : index
    %11 = vector.load %arg4[%c0_7, %c0_8] : memref<8x128xf32, #tpu.memory_space<vmem>>, vector<8x128xf32>
    tpu.vector_store %arg4[%c0_7, %c0_8], %10 {strides = array<i32>} : memref<8x128xf32, #tpu.memory_space<vmem>>, vector<8x128xf32>,
    return
  }
  func.func @transform_0(%arg0: i32) -> (i32, i32) {
    %c0_i32 = arith.constant 0 : i32
    %c0_i32_0 = arith.constant 0 : i32
    %c0_i32_1 = arith.constant 0 : i32
    return %c0_i32, %c0_i32_0 : i32, i32
  }
  func.func @transform_1(%arg0: i32) -> (i32, i32) {
    %c0_i32 = arith.constant 0 : i32
    %c0_i32_0 = arith.constant 0 : i32
    return %c0_i32, %arg0 : i32, i32
  }
  func.func @transform_2(%arg0: i32) -> (i32, i32) {
    %c0_i32 = arith.constant 0 : i32
    %c0_i32_0 = arith.constant 0 : i32
    %c0_i32_1 = arith.constant 0 : i32
    return %c0_i32, %c0_i32_0 : i32, i32
  }
  func.func @transform_3(%arg0: i32) -> (i32, i32) {
    %c0_i32 = arith.constant 0 : i32
    %c0_i32_0 = arith.constant 0 : i32
    return %c0_i32, %arg0 : i32, i32
  }
}

</mosaic_0001>

<llo_original>
// kernel: tpu_custom_call.1
$region0: #{tpu_custom_call.1}
  #allocation0 [shape = 'u32[]', space=smem, size = 0x4, offset = 0x4, fixed_abs, tag = 'smem constant byte address 0x4 - core index']
  #allocation1 [shape = 'u32[144,128]{1,0:T(1,128)}', space=vmem, size = 0x12000, scoped, tag = 'internal scratch']
  %s0 = inlined_call_operand.vmem [shape: f32[8,16], index: 0, kind: input, shape index: {}]
  %s1 = inlined_call_operand.hbm [shape: f32[16,128], index: 1, kind: input, shape index: {}]
  %s2 = inlined_call_operand.vmem [shape: f32[8,1], index: 2, kind: input, shape index: {}]
  %s3 = inlined_call_operand.hbm [shape: f32[8,128], index: 3, kind: output, shape index: {}]
  %s4 = sld [smem:[#allocation0]]
  $region26: #{tpu_custom_call.1} parent=0
    _
  %s6 = ssub.s32 1, %s4
  %s7 = scalar_select 0, %s6, %s4
  $region1: #{tpu_custom_call.1} parent=0
    #allocation2 [shape = 'u8[8192]{0}', space=vmem, size = 0x2000, scoped, tag = 'input window, operand 1, single buffered']
    #allocation3 [shape = 's32[1]{0}', space=sflag, size = 0x4, scoped, tag = 'scoped memory for tpu_custom_call.1']
    #allocation4 [shape = 's32[1]{0}', space=sflag, size = 0x4, scoped, tag = 'scoped memory for tpu_custom_call.1']
    #allocation5 [shape = 'u8[4096]{0}', space=vmem, size = 0x1000, scoped, tag = 'output window, operand 0, single buffered']
    %8 = vsyncpa [#allocation3], 0
    %9 = vsyncpa [#allocation4], 0
    // Predicated region
    $region2: #{tpu_custom_call.1} parent=1 // pred_check
      _
    $region3: #{tpu_custom_call.1} parent=1 // pred_check_branch
      %11 = sbr.rel (0) target = $region5
    $region4: #{tpu_custom_call.1} parent=1 // pred_region
      _
    $region5: #{tpu_custom_call.1} parent=1 // pred_fallthru
      _
    // Predicated region
    $region6: #{tpu_custom_call.1} parent=1 // pred_check
      _
    $region7: #{tpu_custom_call.1} parent=1 // pred_check_branch
      %13 = sbr.rel (0) target = $region9
    $region8: #{tpu_custom_call.1} parent=1 // pred_region
      %s15 = ssub.s32 256, 256
      %16 = vsyncadd [#allocation3], %s15
      %s17 = sshll.u32 [#allocation2], 4
      %s18 = int_to_ptr.vmem [resolvable:$true] %s17
      %23 = dma.hbm_to_vmem [thread:$0]  %s1, 256, %s18, [#allocation3], 128, 128, 8
    $region9: #{tpu_custom_call.1} parent=1 // pred_fallthru
      _
    // Predicated region
    $region10: #{tpu_custom_call.1} parent=1 // pred_check
      _
    $region11: #{tpu_custom_call.1} parent=1 // pred_check_branch
      %25 = sbr.rel (0) target = $region13
    $region12: #{tpu_custom_call.1} parent=1 // pred_region
      _
    $region13: #{tpu_custom_call.1} parent=1 // pred_fallthru
      _
    // Predicated region
    $region14: #{tpu_custom_call.1} parent=1 // pred_check
      _
    $region15: #{tpu_custom_call.1} parent=1 // pred_check_branch
      %27 = sbr.rel (0) target = $region17
    $region16: #{tpu_custom_call.1} parent=1 // pred_region
      %28 = dma.done [#allocation3], 256
    $region17: #{tpu_custom_call.1} parent=1 // pred_fallthru
      _
    %v29 = vld [vmem:[%s0] sm:$0xff]
    %v30 = vld [vmem:[#allocation2] sm:$0xff]
    %v31 = vld [vmem:[#allocation2 + $0x8] sm:$0xff]
    %v32 = vld [vmem:[%s2] sm:$0xff]
    %34 = vset.pattern.permute.xlu0 0
    %35 = vperm.xlu0 %34, %v32
    %v36 = vpop.permute.xlu0 %35
    %vm38 = vcmask 130048
    %v40 = vsel %vm38, %v29, 0
    %42 = vmatprep.subr.mxu0 0.0
    %43 = vmatpush1.msra.mxu0 %v30
    %44 = vmatprep.subr.mxu0 0.0
    %45 = vmatpush1.msra.mxu0 %v31
    %46 = vmatprep.subr.mxu0 0.0
    %47 = vmatpush1.msra.mxu0 0.0
    %48 = vmatprep.subr.mxu0 0.0
    %49 = vmatpush1.msra.mxu0 0.0
    %50 = vmatprep.subr.mxu0 0.0
    %51 = vmatpush1.msra.mxu0 0.0
    %52 = vmatprep.subr.mxu0 0.0
    %53 = vmatpush1.msra.mxu0 0.0
    %54 = vmatprep.subr.mxu0 0.0
    %55 = vmatpush1.msra.mxu0 0.0
    %56 = vmatprep.subr.mxu0 0.0
    %57 = vmatpush1.msra.mxu0 0.0
    %58 = vmatprep.subr.mxu0 0.0
    %59 = vmatpush1.msra.mxu0 0.0
    %60 = vmatprep.subr.mxu0 0.0
    %61 = vmatpush1.msra.mxu0 0.0
    %62 = vmatprep.subr.mxu0 0.0
    %63 = vmatpush1.msra.mxu0 0.0
    %64 = vmatprep.subr.mxu0 0.0
    %65 = vmatpush1.msra.mxu0 0.0
    %66 = vmatprep.subr.mxu0 0.0
    %67 = vmatpush1.msra.mxu0 0.0
    %68 = vmatprep.subr.mxu0 0.0
    %69 = vmatpush1.msra.mxu0 0.0
    %70 = vmatprep.subr.mxu0 0.0
    %71 = vmatpush1.msra.mxu0 0.0
    %72 = vmatprep.subr.mxu0 0.0
    %73 = vmatpush1.msra.mxu0 0.0
    %74 = vmatprep.subr.mxu0 0.0
    %75 = vmatpush1.msra.mxu0 0.0
    %76 = vmatprep.subr.mxu0 0.0
    %77 = vmatpush1.msra.mxu0 0.0
    %78 = vmatprep.subr.mxu0 0.0
    %79 = vmatpush1.msra.mxu0 0.0
    %80 = vmatprep.subr.mxu0 0.0
    %81 = vmatpush1.msra.mxu0 0.0
    %82 = vmatprep.subr.mxu0 0.0
    %83 = vmatpush1.msra.mxu0 0.0
    %84 = vmatprep.subr.mxu0 0.0
    %85 = vmatpush1.msra.mxu0 0.0
    %86 = vmatprep.subr.mxu0 0.0
    %87 = vmatpush1.msra.mxu0 0.0
    %88 = vmatprep.subr.mxu0 0.0
    %89 = vmatpush1.msra.mxu0 0.0
    %90 = vmatprep.subr.mxu0 0.0
    %91 = vmatpush1.msra.mxu0 0.0
    %92 = vmatprep.subr.mxu0 0.0
    %93 = vmatpush1.msra.mxu0 0.0
    %94 = vmatprep.subr.mxu0 0.0
    %95 = vmatpush1.msra.mxu0 0.0
    %96 = vmatprep.subr.mxu0 0.0
    %97 = vmatpush1.msra.mxu0 0.0
    %98 = vmatprep.subr.mxu0 0.0
    %99 = vmatpush1.msra.mxu0 0.0
    %100 = vmatprep.subr.mxu0 0.0
    %101 = vmatpush1.msra.mxu0 0.0
    %102 = vmatprep.subr.mxu0 0.0
    %103 = vmatpush1.msra.mxu0 0.0
    %104 = vmatprep.subr.mxu0 0.0
    %105 = vmatpush1.msra.mxu0 0.0
    %106 = vmatprep.mubr.f32.mxu0 0.0
    %107 = vmatmul.mubr.f32.gmra.mrb[0].mxu0 %v40
    %v108 = vpop.f32.mrb[0].mxu0
    %v109 = vadd.f32 %v36, %v108
    %v110 = vpop.f32.mrb[0].mxu0
    %111 = vdwg.mxu0
    %vm112 = vcmp.ge.f32.partialorder %v109, 0.0
    %v113 = vmul.f32 %v109, 0.1
    %v114 = vsel %vm112, %v109, %v113
    %115 = vst [vmem:[#allocation5] sm:$0xff] %v114
    // Predicated region
    $region18: #{tpu_custom_call.1} parent=1 // pred_check
      _
    $region19: #{tpu_custom_call.1} parent=1 // pred_check_branch
      %117 = sbr.rel (0) target = $region21
    $region20: #{tpu_custom_call.1} parent=1 // pred_region
      %s119 = ssub.s32 128, 128
      %120 = vsyncadd [#allocation4], %s119
      %s122 = sshll.u32 [#allocation5], 4
      %s123 = int_to_ptr.vmem [resolvable:$true] %s122
      %125 = dma.vmem_to_hbm [thread:$0]  %s123, 128, %s3, [#allocation4]
    $region21: #{tpu_custom_call.1} parent=1 // pred_fallthru
      _
    // Predicated region
    $region22: #{tpu_custom_call.1} parent=1 // pred_check
      _
    $region23: #{tpu_custom_call.1} parent=1 // pred_check_branch
      %127 = sbr.rel (0) target = $region25
    $region24: #{tpu_custom_call.1} parent=1 // pred_region
      %128 = dma.done [#allocation4], 128
    $region25: #{tpu_custom_call.1} parent=1 // pred_fallthru
      _
    %129 = vsyncpa [#allocation3], 1
    %130 = vsyncpa [#allocation4], 1

</llo_original>
